<compile_context>
chip_gen: v7x
topology: tpu7x:2x2x1
jax: 0.10.0
libtpu: 0.0.40
codegen_flags: <defaults>
</compile_context>

<pallas_src>
import jax
import jax.numpy as jnp
from jax.experimental import pallas as pl
from jax.experimental.pallas import tpu as pltpu


# --------------------------------------------------------------------------------------
# Kernel
# --------------------------------------------------------------------------------------
def _make_mlp_kernel(n_hidden, bf16_silu):
    """Kernel for: Linear(in,hid)+SiLU -> n_hidden x (Linear(hid,hid)+SiLU) -> Linear(hid,1).

    Activations are kept transposed: h^T has shape (hid, batch_tile) so the batch
    dimension lives on the lane axis for every op.
    """
    act_dtype = jnp.bfloat16 if bf16_silu else jnp.float32

    def silu(h_f32):
        h = h_f32.astype(act_dtype)
        return h * jax.lax.logistic(h)

    def kernel(xT_ref, w_in_ref, w_hid_ref, b_all_ref, w_out_ref, b_out_ref, out_ref):
        # First layer:  h^T = W_in @ x^T  -> (hid, bt).  bf16 MXU inputs, f32 accumulate.
        h = jnp.dot(w_in_ref[...], xT_ref[...],                     # (hid,in) @ (in,bt)
                    preferred_element_type=jnp.float32)             # (hid, bt) f32
        h = silu(h + b_all_ref[0])                                  # (hid,1) lane-broadcast

        # Hidden layers (unrolled; n_hidden is small and static).
        for li in range(n_hidden):
            h = jnp.dot(w_hid_ref[li], h.astype(jnp.bfloat16),      # (hid,hid) @ (hid,bt)
                        preferred_element_type=jnp.float32)
            h = silu(h + b_all_ref[li + 1])

        # Final Linear(hid -> 1) as VPU multiply + sublane reduction (no N=1 MXU pass).
        # Result is lane-dense: (1, bt).
        out = jnp.sum(h.astype(jnp.float32) * w_out_ref[...], axis=0, keepdims=True)
        out = out + b_out_ref[...]
        out_ref[...] = out[None].astype(out_ref.dtype)              # (1, 1, bt)

    return kernel


# --------------------------------------------------------------------------------------
# Wrapper
# --------------------------------------------------------------------------------------
def _round_up(v, m):
    return ((v + m - 1) // m) * m


def _pick_batch_tile(batch, requested):
    """Lane-aligned tile (multiple of 256 preferred, 128 min), capped so the grid keeps
    >= 2 steps when the batch allows it (v7x has 2 TensorCores)."""
    requested = max(128, (requested // 128) * 128)
    if batch <= 256:
        return min(requested, _round_up(batch, 128))
    half = _round_up((batch + 1) // 2, 256)
    return max(256, min(requested, half))


def _default_bf16_silu():
    """bf16 SiLU on chips with a bf16 VPU/EUP path (v6e/v7x); f32 on v5 and older."""
    try:
        kind = jax.devices()[0].device_kind.lower()
    except Exception:
        return False
    for old in ("v2", "v3", "v4", "v5"):
        if old in kind:
            return False
    return True


def cp_diff_mlp_forward(x, params, *, batch_tile=1024, bf16_silu=None):
    """CPDiffMLP forward via one pallas_call.

    x:      (batch, inDim) float32
    params: list of (W, b) in PyTorch nn.Linear layout: W (fan_out, fan_in), b (fan_out,).
    Returns (batch, 1) float32.
    """
    batch, in_dim = x.shape
    n_linear = len(params)
    assert n_linear >= 2, "need at least input and output Linear layers"
    hid = params[0][0].shape[0]
    n_hidden = n_linear - 2  # number of hid->hid Linear layers

    if bf16_silu is None:
        bf16_silu = _default_bf16_silu()

    bt = _pick_batch_tile(batch, batch_tile)
    num_tiles = pl.cdiv(batch, bt)
    batch_pad = num_tiles * bt

    # Pad batch, transpose to (in_dim, batch_pad) so batch is lane-dense, cast to bf16
    # once (halves the per-row HBM read stream; tail rows are computed then discarded).
    xp = x
    if batch_pad != batch:
        xp = jnp.pad(xp, ((0, batch_pad - batch), (0, 0)))
    x_t = jnp.transpose(xp).astype(jnp.bfloat16)                    # (in_dim, batch_pad)

    # --- Pack parameters into a few consolidated, VMEM-resident arrays -----------------
    w_in = params[0][0].astype(jnp.bfloat16)                        # (hid, in_dim)
    if n_hidden > 0:
        w_hid = jnp.stack([w for (w, _) in params[1:-1]]).astype(jnp.bfloat16)
    else:
        # Dummy (never read when n_hidden == 0); keeps the kernel signature fixed.
        w_hid = jnp.zeros((1, hid, hid), jnp.bfloat16)
    # Biases of all layers that output `hid`, shaped for the transposed layout.
    b_all = jnp.stack([b.reshape(hid, 1) for (_, b) in params[:-1]]).astype(jnp.float32)
    # Final layer: W (1, hid) -> column (hid, 1); bias scalar -> (1, 1).
    w_out = params[-1][0].reshape(hid, 1).astype(jnp.float32)
    b_out = params[-1][1].reshape(1, 1).astype(jnp.float32)

    kernel = _make_mlp_kernel(n_hidden, bf16_silu)

    out3 = pl.pallas_call(
        kernel,
        out_shape=jax.ShapeDtypeStruct((num_tiles, 1, bt), jnp.float32),  # pinned f32
        grid=(num_tiles,),
        in_specs=[
            pl.BlockSpec((in_dim, bt), lambda i: (0, i)),           # x^T tile, lane-dense
            pl.BlockSpec(w_in.shape, lambda i: (0, 0)),             # resident weights
            pl.BlockSpec(w_hid.shape, lambda i: (0, 0, 0)),
            pl.BlockSpec(b_all.shape, lambda i: (0, 0, 0)),
            pl.BlockSpec(w_out.shape, lambda i: (0, 0)),
            pl.BlockSpec(b_out.shape, lambda i: (0, 0)),
        ],
        out_specs=pl.BlockSpec((1, 1, bt), lambda i: (i, 0, 0)),
        compiler_params=pltpu.CompilerParams(
            dimension_semantics=("parallel",),        # shard grid steps across TCs (v7x)
            vmem_limit_bytes=32 * 1024 * 1024,        # cheap insurance on v5e defaults
        ),
    )(x_t, w_in, w_hid, b_all, w_out, b_out)

    # (num_tiles, 1, bt) -> (batch, 1)
    return out3.reshape(batch_pad, 1)[:batch]


# --------------------------------------------------------------------------------------
# Init + reference
# --------------------------------------------------------------------------------------
def init_cp_diff_mlp_params(key, in_dim, hid_dim, n_layers):
    """PyTorch nn.Linear-style init: W,b ~ U(-1/sqrt(fan_in), 1/sqrt(fan_in)),
    W in (fan_out, fan_in) layout, b in (fan_out,)."""
    dims = [(hid_dim, in_dim)]
    for _ in range(n_layers - 1):
        dims.append((hid_dim, hid_dim))
    dims.append((1, hid_dim))

    params = []
    for (fan_out, fan_in) in dims:
        key, kw, kb = jax.random.split(key, 3)
        bound = 1.0 / (fan_in ** 0.5)
        w = jax.random.uniform(kw, (fan_out, fan_in), jnp.float32, -bound, bound)
        b = jax.random.uniform(kb, (fan_out,), jnp.float32, -bound, bound)
        params.append((w, b))
    return params


def cp_diff_mlp_reference(x, params):
    """Pure-JAX f32 reference matching the PyTorch module."""
    h = x
    n_linear = len(params)
    for li, (w, b) in enumerate(params):
        h = h @ w.T + b
        if li < n_linear - 1:
            h = h * jax.nn.sigmoid(h)  # SiLU
    return h


if __name__ == "__main__":
    # Small shapes consistent with the module (x: (batch, inDim)).  batch=1000 exercises
    # tile capping (-> bt=512), a 2-step grid (both v7x TCs), and the padding path.
    batch, in_dim, hid_dim, n_layers = 1000, 16, 32, 3

    key = jax.random.PRNGKey(0)
    key, kx = jax.random.split(key)
    x = jax.random.normal(kx, (batch, in_dim), jnp.float32)

    params = init_cp_diff_mlp_params(key, in_dim, hid_dim, n_layers)

    out = cp_diff_mlp_forward(x, params)
    out = jax.block_until_ready(out)

    ref = cp_diff_mlp_reference(x, params)
    assert out.shape == (batch, 1)
    assert out.dtype == jnp.float32
    # bf16 MXU inputs / bf16 SiLU (on v6e+) vs f32 reference -> loose-but-meaningful tol.
    max_err = float(jnp.max(jnp.abs(out - ref)))
    assert jnp.allclose(out, ref, rtol=5e-2, atol=5e-2), \
        f"mismatch vs reference (max abs err {max_err})"

    print("KERNEL_OK")
</pallas_src>

<mosaic_0001>
module attributes {stable_mosaic.version = 11 : i64} {
  func.func @kernel(%arg0: i32, %arg1: memref<16x512xbf16, #tpu.memory_space<vmem>>, %arg2: memref<32x16xbf16, #tpu.memory_space<vmem>>, %arg3: memref<2x32x32xbf16, #tpu.memory_space<vmem>>, %arg4: memref<3x32x1xf32, #tpu.memory_space<vmem>>, %arg5: memref<32x1xf32, #tpu.memory_space<vmem>>, %arg6: memref<1x1xf32, #tpu.memory_space<vmem>>, %arg7: memref<1x1x512xf32, #tpu.memory_space<vmem>>) attributes {dimension_semantics = [#tpu.dimension_semantics<parallel>], iteration_bounds = array<i64: 2>, scalar_prefetch = 0 : i64, scratch_operands = 0 : i64, tpu.core_type = #tpu.core_type<tc>, window_params = [{transform_indices = @transform_0, window_bounds = array<i64: 16, 512>}, {pipeline_mode = #tpu.pipeline_mode<synchronous>, transform_indices = @transform_1, window_bounds = array<i64: 32, 16>}, {pipeline_mode = #tpu.pipeline_mode<synchronous>, transform_indices = @transform_2, window_bounds = array<i64: 2, 32, 32>}, {pipeline_mode = #tpu.pipeline_mode<synchronous>, transform_indices = @transform_3, window_bounds = array<i64: 3, 32, 1>}, {pipeline_mode = #tpu.pipeline_mode<synchronous>, transform_indices = @transform_4, window_bounds = array<i64: 32, 1>}, {pipeline_mode = #tpu.pipeline_mode<synchronous>, transform_indices = @transform_5, window_bounds = array<i64: 1, 1>}, {transform_indices = @transform_6, window_bounds = array<i64: 1, 1, 512>}]} {
    %c0 = arith.constant 0 : index
    %c0_0 = arith.constant 0 : index
    %0 = vector.load %arg2[%c0, %c0_0] : memref<32x16xbf16, #tpu.memory_space<vmem>>, vector<32x16xbf16>
    %c0_1 = arith.constant 0 : index
    %c0_2 = arith.constant 0 : index
    %1 = vector.load %arg1[%c0_1, %c0_2] : memref<16x512xbf16, #tpu.memory_space<vmem>>, vector<16x512xbf16>
    %cst = arith.constant dense<0.000000e+00> : vector<32x512xf32>
    %2 = tpu.matmul %0, %1, %cst {dimension_numbers = #tpu.dot_dimension_numbers<[1], [0], [0], [1], [0, 0, 1, 1], [], []>} : vector<32x16xbf16>, vector<16x512xbf16>, vector<32x512xf32> -> vector<32x512xf32>
    %c0_3 = arith.constant 0 : index
    %c0_4 = arith.constant 0 : index
    %c0_5 = arith.constant 0 : index
    %3 = vector.load %arg4[%c0_3, %c0_4, %c0_5] : memref<3x32x1xf32, #tpu.memory_space<vmem>>, vector<1x32x1xf32>
    %4 = vector.shape_cast %3 : vector<1x32x1xf32> to vector<32x1xf32>
    %5 = vector.broadcast %4 : vector<32x1xf32> to vector<32x512xf32>
    %6 = arith.addf %2, %5 : vector<32x512xf32>
    %7 = arith.truncf %6 : vector<32x512xf32> to vector<32x512xbf16>
    %8 = arith.negf %7 : vector<32x512xbf16>
    %9 = math.exp %8 : vector<32x512xbf16>
    %cst_6 = arith.constant 1.000000e+00 : bf16
    %10 = vector.broadcast %cst_6 : bf16 to vector<32x512xbf16>
    %11 = arith.addf %10, %9 : vector<32x512xbf16>
    %12 = arith.divf %10, %11 : vector<32x512xbf16>
    %13 = arith.mulf %7, %12 : vector<32x512xbf16>
    %c0_7 = arith.constant 0 : index
    %c0_8 = arith.constant 0 : index
    %c0_9 = arith.constant 0 : index
    %14 = vector.load %arg3[%c0_7, %c0_8, %c0_9] : memref<2x32x32xbf16, #tpu.memory_space<vmem>>, vector<1x32x32xbf16>
    %15 = vector.shape_cast %14 : vector<1x32x32xbf16> to vector<32x32xbf16>
    %cst_10 = arith.constant dense<0.000000e+00> : vector<32x512xf32>
    %16 = tpu.matmul %15, %13, %cst_10 {dimension_numbers = #tpu.dot_dimension_numbers<[1], [0], [0], [1], [0, 0, 1, 1], [], []>} : vector<32x32xbf16>, vector<32x512xbf16>, vector<32x512xf32> -> vector<32x512xf32>
    %c1 = arith.constant 1 : index
    %c0_11 = arith.constant 0 : index
    %c0_12 = arith.constant 0 : index
    %17 = vector.load %arg4[%c1, %c0_11, %c0_12] : memref<3x32x1xf32, #tpu.memory_space<vmem>>, vector<1x32x1xf32>
    %18 = vector.shape_cast %17 : vector<1x32x1xf32> to vector<32x1xf32>
    %19 = vector.broadcast %18 : vector<32x1xf32> to vector<32x512xf32>
    %20 = arith.addf %16, %19 : vector<32x512xf32>
    %21 = arith.truncf %20 : vector<32x512xf32> to vector<32x512xbf16>
    %22 = arith.negf %21 : vector<32x512xbf16>
    %23 = math.exp %22 : vector<32x512xbf16>
    %cst_13 = arith.constant 1.000000e+00 : bf16
    %24 = vector.broadcast %cst_13 : bf16 to vector<32x512xbf16>
    %25 = arith.addf %24, %23 : vector<32x512xbf16>
    %26 = arith.divf %24, %25 : vector<32x512xbf16>
    %27 = arith.mulf %21, %26 : vector<32x512xbf16>
    %c1_14 = arith.constant 1 : index
    %c0_15 = arith.constant 0 : index
    %c0_16 = arith.constant 0 : index
    %28 = vector.load %arg3[%c1_14, %c0_15, %c0_16] : memref<2x32x32xbf16, #tpu.memory_space<vmem>>, vector<1x32x32xbf16>
    %29 = vector.shape_cast %28 : vector<1x32x32xbf16> to vector<32x32xbf16>
    %cst_17 = arith.constant dense<0.000000e+00> : vector<32x512xf32>
    %30 = tpu.matmul %29, %27, %cst_17 {dimension_numbers = #tpu.dot_dimension_numbers<[1], [0], [0], [1], [0, 0, 1, 1], [], []>} : vector<32x32xbf16>, vector<32x512xbf16>, vector<32x512xf32> -> vector<32x512xf32>
    %c2 = arith.constant 2 : index
    %c0_18 = arith.constant 0 : index
    %c0_19 = arith.constant 0 : index
    %31 = vector.load %arg4[%c2, %c0_18, %c0_19] : memref<3x32x1xf32, #tpu.memory_space<vmem>>, vector<1x32x1xf32>
    %32 = vector.shape_cast %31 : vector<1x32x1xf32> to vector<32x1xf32>
    %33 = vector.broadcast %32 : vector<32x1xf32> to vector<32x512xf32>
    %34 = arith.addf %30, %33 : vector<32x512xf32>
    %35 = arith.truncf %34 : vector<32x512xf32> to vector<32x512xbf16>
    %36 = arith.negf %35 : vector<32x512xbf16>
    %37 = math.exp %36 : vector<32x512xbf16>
    %cst_20 = arith.constant 1.000000e+00 : bf16
    %38 = vector.broadcast %cst_20 : bf16 to vector<32x512xbf16>
    %39 = arith.addf %38, %37 : vector<32x512xbf16>
    %40 = arith.divf %38, %39 : vector<32x512xbf16>
    %41 = arith.mulf %35, %40 : vector<32x512xbf16>
    %42 = arith.extf %41 : vector<32x512xbf16> to vector<32x512xf32>
    %c0_21 = arith.constant 0 : index
    %c0_22 = arith.constant 0 : index
    %43 = vector.load %arg5[%c0_21, %c0_22] : memref<32x1xf32, #tpu.memory_space<vmem>>, vector<32x1xf32>
    %44 = vector.broadcast %43 : vector<32x1xf32> to vector<32x512xf32>
    %45 = arith.mulf %42, %44 : vector<32x512xf32>
    %cst_23 = arith.constant dense<0.000000e+00> : vector<512xf32>
    %46 = vector.multi_reduction <add>, %45, %cst_23 [0] : vector<32x512xf32> to vector<512xf32>
    %47 = vector.shape_cast %46 : vector<512xf32> to vector<1x512xf32>
    %c0_24 = arith.constant 0 : index
    %c0_25 = arith.constant 0 : index
    %48 = vector.load %arg6[%c0_24, %c0_25] : memref<1x1xf32, #tpu.memory_space<vmem>>, vector<1x1xf32>
    %49 = vector.broadcast %48 : vector<1x1xf32> to vector<1x512xf32>
    %50 = arith.addf %47, %49 : vector<1x512xf32>
    %51 = vector.shape_cast %50 : vector<1x512xf32> to vector<1x1x512xf32>
    %c0_26 = arith.constant 0 : index
    %c0_27 = arith.constant 0 : index
    %c0_28 = arith.constant 0 : index
    %52 = vector.load %arg7[%c0_26, %c0_27, %c0_28] : memref<1x1x512xf32, #tpu.memory_space<vmem>>, vector<1x1x512xf32>
    tpu.vector_store %arg7[%c0_26, %c0_27, %c0_28], %51 {strides = array<i32>} : memref<1x1x512xf32, #tpu.memory_space<vmem>>, vector<1x1x512xf32>,
    return
  }
  func.func @transform_0(%arg0: i32) -> (i32, i32) {
    %c0_i32 = arith.constant 0 : i32
    %c0_i32_0 = arith.constant 0 : i32
    return %c0_i32, %arg0 : i32, i32
  }
  func.func @transform_1(%arg0: i32) -> (i32, i32) {
    %c0_i32 = arith.constant 0 : i32
    %c0_i32_0 = arith.constant 0 : i32
    %c0_i32_1 = arith.constant 0 : i32
    return %c0_i32, %c0_i32_0 : i32, i32
  }
  func.func @transform_2(%arg0: i32) -> (i32, i32, i32) {
    %c0_i32 = arith.constant 0 : i32
    %c0_i32_0 = arith.constant 0 : i32
    %c0_i32_1 = arith.constant 0 : i32
    %c0_i32_2 = arith.constant 0 : i32
    return %c0_i32, %c0_i32_0, %c0_i32_1 : i32, i32, i32
  }
  func.func @transform_3(%arg0: i32) -> (i32, i32, i32) {
    %c0_i32 = arith.constant 0 : i32
    %c0_i32_0 = arith.constant 0 : i32
    %c0_i32_1 = arith.constant 0 : i32
    %c0_i32_2 = arith.constant 0 : i32
    return %c0_i32, %c0_i32_0, %c0_i32_1 : i32, i32, i32
  }
  func.func @transform_4(%arg0: i32) -> (i32, i32) {
    %c0_i32 = arith.constant 0 : i32
    %c0_i32_0 = arith.constant 0 : i32
    %c0_i32_1 = arith.constant 0 : i32
    return %c0_i32, %c0_i32_0 : i32, i32
  }
  func.func @transform_5(%arg0: i32) -> (i32, i32) {
    %c0_i32 = arith.constant 0 : i32
    %c0_i32_0 = arith.constant 0 : i32
    %c0_i32_1 = arith.constant 0 : i32
    return %c0_i32, %c0_i32_0 : i32, i32
  }
  func.func @transform_6(%arg0: i32) -> (i32, i32, i32) {
    %c0_i32 = arith.constant 0 : i32
    %c0_i32_0 = arith.constant 0 : i32
    %c0_i32_1 = arith.constant 0 : i32
    return %arg0, %c0_i32, %c0_i32_0 : i32, i32, i32
  }
}

</mosaic_0001>

<llo_original>
// kernel: tpu_custom_call.1
$region0: #{tpu_custom_call.1}
  #allocation0 [shape = 'u32[]', space=smem, size = 0x4, offset = 0x4, fixed_abs, tag = 'smem constant byte address 0x4 - core index']
  #allocation1 [shape = 'u32[144,128]{1,0:T(1,128)}', space=vmem, size = 0x12000, scoped, tag = 'internal scratch']
  #allocation2 [shape = 'f32[1,1]{1,0:T(1,128)S(1)}', space=vmem, size = 0x200, scoped, tag = 'scoped memory for tpu_custom_call.1']
  %s0 = inlined_call_operand.vmem [shape: bf16[16,1024], index: 0, kind: input, shape index: {}]
  %s1 = inlined_call_operand.vmem [shape: bf16[32,16], index: 1, kind: input, shape index: {}]
  %s2 = inlined_call_operand.vmem [shape: bf16[2,32,32], index: 2, kind: input, shape index: {}]
  %s3 = inlined_call_operand.vmem [shape: f32[3,32,1], index: 3, kind: input, shape index: {}]
  %s4 = inlined_call_operand.vmem [shape: f32[32,1], index: 4, kind: input, shape index: {}]
  %s5 = inlined_call_operand.<no memory space> [shape: f32[1,1], index: 5, kind: input, shape index: {}]
  %s6 = inlined_call_operand.hbm [shape: f32[2,1,512], index: 6, kind: output, shape index: {}]
  %s7 = sld [smem:[#allocation0]]
  $region80: #{tpu_custom_call.1} parent=0
    _
  %s9 = ssub.s32 1, %s7
  %s10 = scalar_select 0, %s9, %s7
  %v11 = vstv %s5
  %12 = vst [vmem:[#allocation2] sm:$0x1] %v11
  $region1: #{tpu_custom_call.1} parent=0
    #allocation3 [shape = 'u8[32768]{0}', space=vmem, size = 0x8000, scoped, tag = 'input window, operand 0']
    #allocation4 [shape = 'u8[4096]{0}', space=vmem, size = 0x1000, scoped, tag = 'output window, operand 0']
    #allocation5 [shape = 's32[2]{0}', space=sflag, size = 0x8, scoped, tag = 'scoped memory for tpu_custom_call.1']
    %13 = vsyncpa [#allocation5], 0
    %s14 = scalar_lea.sflag [#allocation5], 1
    %15 = vsyncpa %s14, 0
    loop: start=0, step=1, limit=4
    $region2: #{tpu_custom_call.1} parent=1 // loop_pre_header
      _
    $region3: #{tpu_custom_call.1} parent=1 // loop_header
      %s17 = sphi 0, %s21
      %p18 = scmp.ge.s32.totalorder %s17, 4
      %s27 = sphi 0, %s29
      %s30 = sphi 0, %s27
      %s31 = sphi 0, %s30
      %s47 = sphi 0, %s31
      %s51 = sphi 0, %s51
      %s53 = sphi 0, %s51
      %s54 = sphi 0, %s53
      %s68 = sphi 0, %s54
      %s72 = sphi 0, %s72
      %s74 = sphi 0, %s72
      %s75 = sphi 0, %s74
      %s89 = sphi 0, %s75
      %s93 = sphi 0, %s93
      %s95 = sphi 0, %s93
      %s96 = sphi 0, %s95
      %s110 = sphi 0, %s96
      %s114 = sphi 0, %s114
      %s116 = sphi 0, %s114
      %s117 = sphi 0, %s116
      %s131 = sphi 0, %s117
      %s135 = sphi 0, %s135
      %s137 = sphi 0, %s135
      %s138 = sphi 0, %s137
      %s152 = sphi 0, %s138
      %s158 = sphi 0, %s160
      %s161 = sphi 0, %s158
      %s162 = sphi 0, %s161
      %s178 = sphi 0, %s162
    $region4: #{tpu_custom_call.1} parent=1 // loop_header_branch
      %20 = sbr.rel (%p18) target = $region8
    $region5: #{tpu_custom_call.1} parent=1 // loop_body
      %s22 = ssub.s32 %s17, 1
      %s23 = ssub.s32 %s17, 2
      %s24 = sadd.s32 %s17, 1
      %s25 = ssub.s32 %s17, %s24
      %p26 = scmp.eq.s32.totalorder %s25, 0
      %s28 = sadd.s32 %s27, 1
      %s29 = scalar_select %p26, %s27, %s28
      %p32 = pneg %p26
      %p33 = scmp.eq.s32.totalorder %s17, 1
      %p34 = por %p32, %p33
      %p35 = scmp.ne.s32.totalorder %s27, %s30
      %p36 = scmp.eq.s32.totalorder %s17, 0
      %p37 = por %p35, %p36
      %p38 = scmp.ne.s32.totalorder %s27, %s30
      %p39 = scmp.eq.s32.totalorder %s22, 1
      %p40 = por %p38, %p39
      %p41 = scmp.ne.s32.totalorder %s30, %s31
      %p42 = scmp.eq.s32.totalorder %s22, 0
      %p43 = por %p41, %p42
      %p44 = scmp.ne.s32.totalorder %s30, %s31
      %p45 = scmp.eq.s32.totalorder %s23, 1
      %p46 = por %p44, %p45
      %p48 = scmp.ne.s32.totalorder %s31, %s47
      %p49 = scmp.eq.s32.totalorder %s23, 0
      %p50 = por %p48, %p49
      %s52 = sadd.s32 %s51, 1
      %p55 = scmp.eq.s32.totalorder %s17, 1
      %p56 = scmp.ne.s32.totalorder %s51, %s53
      %p57 = scmp.eq.s32.totalorder %s17, 0
      %p58 = por %p56, %p57
      %p59 = scmp.ne.s32.totalorder %s51, %s53
      %p60 = scmp.eq.s32.totalorder %s22, 1
      %p61 = por %p59, %p60
      %p62 = scmp.ne.s32.totalorder %s53, %s54
      %p63 = scmp.eq.s32.totalorder %s22, 0
      %p64 = por %p62, %p63
      %p65 = scmp.ne.s32.totalorder %s53, %s54
      %p66 = scmp.eq.s32.totalorder %s23, 1
      %p67 = por %p65, %p66
      %p69 = scmp.ne.s32.totalorder %s54, %s68
      %p70 = scmp.eq.s32.totalorder %s23, 0
      %p71 = por %p69, %p70
      %s73 = sadd.s32 %s72, 1
      %p76 = scmp.eq.s32.totalorder %s17, 1
      %p77 = scmp.ne.s32.totalorder %s72, %s74
      %p78 = scmp.eq.s32.totalorder %s17, 0
      %p79 = por %p77, %p78
      %p80 = scmp.ne.s32.totalorder %s72, %s74
      %p81 = scmp.eq.s32.totalorder %s22, 1
      %p82 = por %p80, %p81
      %p83 = scmp.ne.s32.totalorder %s74, %s75
      %p84 = scmp.eq.s32.totalorder %s22, 0
      %p85 = por %p83, %p84
      %p86 = scmp.ne.s32.totalorder %s74, %s75
      %p87 = scmp.eq.s32.totalorder %s23, 1
      %p88 = por %p86, %p87
      %p90 = scmp.ne.s32.totalorder %s75, %s89
      %p91 = scmp.eq.s32.totalorder %s23, 0
      %p92 = por %p90, %p91
      %s94 = sadd.s32 %s93, 1
      %p97 = scmp.eq.s32.totalorder %s17, 1
      %p98 = scmp.ne.s32.totalorder %s93, %s95
      %p99 = scmp.eq.s32.totalorder %s17, 0
      %p100 = por %p98, %p99
      %p101 = scmp.ne.s32.totalorder %s93, %s95
      %p102 = scmp.eq.s32.totalorder %s22, 1
      %p103 = por %p101, %p102
      %p104 = scmp.ne.s32.totalorder %s95, %s96
      %p105 = scmp.eq.s32.totalorder %s22, 0
      %p106 = por %p104, %p105
      %p107 = scmp.ne.s32.totalorder %s95, %s96
      %p108 = scmp.eq.s32.totalorder %s23, 1
      %p109 = por %p107, %p108
      %p111 = scmp.ne.s32.totalorder %s96, %s110
      %p112 = scmp.eq.s32.totalorder %s23, 0
      %p113 = por %p111, %p112
      %s115 = sadd.s32 %s114, 1
      %p118 = scmp.eq.s32.totalorder %s17, 1
      %p119 = scmp.ne.s32.totalorder %s114, %s116
      %p120 = scmp.eq.s32.totalorder %s17, 0
      %p121 = por %p119, %p120
      %p122 = scmp.ne.s32.totalorder %s114, %s116
      %p123 = scmp.eq.s32.totalorder %s22, 1
      %p124 = por %p122, %p123
      %p125 = scmp.ne.s32.totalorder %s116, %s117
      %p126 = scmp.eq.s32.totalorder %s22, 0
      %p127 = por %p125, %p126
      %p128 = scmp.ne.s32.totalorder %s116, %s117
      %p129 = scmp.eq.s32.totalorder %s23, 1
      %p130 = por %p128, %p129
      %p132 = scmp.ne.s32.totalorder %s117, %s131
      %p133 = scmp.eq.s32.totalorder %s23, 0
      %p134 = por %p132, %p133
      %s136 = sadd.s32 %s135, 1
      %p139 = scmp.eq.s32.totalorder %s17, 1
      %p140 = scmp.ne.s32.totalorder %s135, %s137
      %p141 = scmp.eq.s32.totalorder %s17, 0
      %p142 = por %p140, %p141
      %p143 = scmp.ne.s32.totalorder %s135, %s137
      %p144 = scmp.eq.s32.totalorder %s22, 1
      %p145 = por %p143, %p144
      %p146 = scmp.ne.s32.totalorder %s137, %s138
      %p147 = scmp.eq.s32.totalorder %s22, 0
      %p148 = por %p146, %p147
      %p149 = scmp.ne.s32.totalorder %s137, %s138
      %p150 = scmp.eq.s32.totalorder %s23, 1
      %p151 = por %p149, %p150
      %p153 = scmp.ne.s32.totalorder %s138, %s152
      %p154 = scmp.eq.s32.totalorder %s23, 0
      %p155 = por %p153, %p154
      %s156 = ssub.s32 %s17, %s24
      %p157 = scmp.eq.s32.totalorder %s156, 0
      %s159 = sadd.s32 %s158, 1
      %s160 = scalar_select %p157, %s158, %s159
      %p163 = pneg %p157
      %p164 = scmp.eq.s32.totalorder %s17, 1
      %p165 = por %p163, %p164
      %p166 = scmp.ne.s32.totalorder %s158, %s161
      %p167 = scmp.eq.s32.totalorder %s17, 0
      %p168 = por %p166, %p167
      %p169 = scmp.ne.s32.totalorder %s158, %s161
      %p170 = scmp.eq.s32.totalorder %s22, 1
      %p171 = por %p169, %p170
      %p172 = scmp.ne.s32.totalorder %s161, %s162
      %p173 = scmp.eq.s32.totalorder %s22, 0
      %p174 = por %p172, %p173
      %p175 = scmp.ne.s32.totalorder %s161, %s162
      %p176 = scmp.eq.s32.totalorder %s23, 1
      %p177 = por %p175, %p176
      %p179 = scmp.ne.s32.totalorder %s162, %s178
      %p180 = scmp.eq.s32.totalorder %s23, 0
      %p181 = por %p179, %p180
      %p182 = scmp.le.s32.totalorder 1, %s17
      %p183 = scmp.lt.s32.totalorder %s17, 3
      %p184 = pnand %p182, %p183
      %p185 = pneg %p184
      // Predicated region
      $region9: #{tpu_custom_call.1} parent=5 // pred_check
        _
      $region10: #{tpu_custom_call.1} parent=5 // pred_check_branch
        %187 = sbr.rel (%p184) target = $region12
      $region11: #{tpu_custom_call.1} parent=5 // pred_region
        %s188 = ssub.s32 %s17, 1
        // Predicated region
        $region13: #{tpu_custom_call.1} parent=11 // pred_check
          %p189 = pneg %p64
        $region14: #{tpu_custom_call.1} parent=11 // pred_check_branch
          %191 = sbr.rel (%p189) target = $region16
        $region15: #{tpu_custom_call.1} parent=11 // pred_region
          _
        $region16: #{tpu_custom_call.1} parent=11 // pred_fallthru
          _
        // Predicated region
        $region17: #{tpu_custom_call.1} parent=11 // pred_check
          %p192 = pneg %p85
        $region18: #{tpu_custom_call.1} parent=11 // pred_check_branch
          %194 = sbr.rel (%p192) target = $region20
        $region19: #{tpu_custom_call.1} parent=11 // pred_region
          _
        $region20: #{tpu_custom_call.1} parent=11 // pred_fallthru
          _
        // Predicated region
        $region21: #{tpu_custom_call.1} parent=11 // pred_check
          %p195 = pneg %p106
        $region22: #{tpu_custom_call.1} parent=11 // pred_check_branch
          %197 = sbr.rel (%p195) target = $region24
        $region23: #{tpu_custom_call.1} parent=11 // pred_region
          _
        $region24: #{tpu_custom_call.1} parent=11 // pred_fallthru
          _
        // Predicated region
        $region25: #{tpu_custom_call.1} parent=11 // pred_check
          %p198 = pneg %p127
        $region26: #{tpu_custom_call.1} parent=11 // pred_check_branch
          %200 = sbr.rel (%p198) target = $region28
        $region27: #{tpu_custom_call.1} parent=11 // pred_region
          _
        $region28: #{tpu_custom_call.1} parent=11 // pred_fallthru
          _
        // Predicated region
        $region29: #{tpu_custom_call.1} parent=11 // pred_check
          %p201 = pneg %p148
        $region30: #{tpu_custom_call.1} parent=11 // pred_check_branch
          %203 = sbr.rel (%p201) target = $region32
        $region31: #{tpu_custom_call.1} parent=11 // pred_region
          _
        $region32: #{tpu_custom_call.1} parent=11 // pred_fallthru
          _
      $region12: #{tpu_custom_call.1} parent=5 // pred_fallthru
        _
      %p204 = scmp.lt.s32.totalorder %s17, 2
      // Predicated region
      $region33: #{tpu_custom_call.1} parent=5 // pred_check
        %p205 = pneg %p204
      $region34: #{tpu_custom_call.1} parent=5 // pred_check_branch
        %207 = sbr.rel (%p205) target = $region36
      $region35: #{tpu_custom_call.1} parent=5 // pred_region
        // Predicated region
        $region37: #{tpu_custom_call.1} parent=35 // pred_check
          %p208 = pneg %p37
        $region38: #{tpu_custom_call.1} parent=35 // pred_check_branch
          %210 = sbr.rel (%p208) target = $region40
        $region39: #{tpu_custom_call.1} parent=35 // pred_region
          %s211 = sand.u32 %s27, 1
          %s212 = sand.u32 %s27, 1
          %s213 = smul.addr %s212, 32
          %s214 = scalar_lea.vmem [#allocation3], %s213
          %s215 = smul.u32 4, %s17
          %s216 = smul.addr %s215, 4
          %s217 = scalar_lea.vmem %s0, %s216
          // Predicated region
          $region41: #{tpu_custom_call.1} parent=39 // pred_check
            _
          $region42: #{tpu_custom_call.1} parent=39 // pred_check_branch
            %219 = sbr.rel (0) target = $region44
          $region43: #{tpu_custom_call.1} parent=39 // pred_region
            // Predicated region
            $region45: #{tpu_custom_call.1} parent=43 // pred_check
              _
            $region46: #{tpu_custom_call.1} parent=43 // pred_check_branch
              %221 = sbr.rel (0) target = $region48
            $region47: #{tpu_custom_call.1} parent=43 // pred_region
              loop: start=0, step=1, limit=1
              $region49: #{tpu_custom_call.1} parent=47 // loop_pre_header
                _
              $region50: #{tpu_custom_call.1} parent=47 // loop_header
                %s223 = sphi 0, %s227
                %p224 = scmp.ge.s32.totalorder %s223, 1
                %s228 = sphi %s217, %s217
                %s229 = sphi %s214, %s214
              $region51: #{tpu_custom_call.1} parent=47 // loop_header_branch
                %226 = sbr.rel (%p224) target = $region55
              $region52: #{tpu_custom_call.1} parent=47 // loop_body
                %v230 = vld [vmem:[%s228] sm:$0xff]
                %231 = vst [vmem:[%s229] sm:$0xff] %v230
                %v232 = vld [vmem:[%s228 + $0x8] sm:$0xff]
                %233 = vst [vmem:[%s229 + $0x8] sm:$0xff] %v232
                %v234 = vld [vmem:[%s228 + $0x20] sm:$0xff]
                %235 = vst [vmem:[%s229 + $0x10] sm:$0xff] %v234
                %v236 = vld [vmem:[%s228 + $0x28] sm:$0xff]
                %237 = vst [vmem:[%s229 + $0x18] sm:$0xff] %v236
              $region53: #{tpu_custom_call.1} parent=47 // loop_footer
                %s227 = sadd.s32 1, %s223
              $region54: #{tpu_custom_call.1} parent=47 // loop_footer_branch
                %222 = sbr.rel target = $region50
              $region55: #{tpu_custom_call.1} parent=47 // loop_exit
                _
            $region48: #{tpu_custom_call.1} parent=43 // pred_fallthru
              _
            // Predicated region
            $region56: #{tpu_custom_call.1} parent=43 // pred_check
              _
            $region57: #{tpu_custom_call.1} parent=43 // pred_check_branch
              %239 = sbr.rel target = $region59
            $region58: #{tpu_custom_call.1} parent=43 // pred_region
              _
            $region59: #{tpu_custom_call.1} parent=43 // pred_fallthru
              _
          $region44: #{tpu_custom_call.1} parent=39 // pred_fallthru
            _
          %240 = vnop
        $region40: #{tpu_custom_call.1} parent=35 // pred_fallthru
          _
      $region36: #{tpu_custom_call.1} parent=5 // pred_fallthru
        _
      %p241 = scmp.le.s32.totalorder 1, %s17
      %p242 = scmp.lt.s32.totalorder %s17, 3
      %p243 = pnand %p241, %p242
      %p244 = pneg %p243
      // Predicated region
      $region60: #{tpu_custom_call.1} parent=5 // pred_check
        _
      $region61: #{tpu_custom_call.1} parent=5 // pred_check_branch
        %246 = sbr.rel (%p243) target = $region63
      $region62: #{tpu_custom_call.1} parent=5 // pred_region
        %s247 = ssub.s32 %s17, 1
        %s248 = sand.u32 %s30, 1
        %s249 = sand.u32 %s30, 1
        %s250 = smul.addr %s249, 32
        %s251 = scalar_lea.vmem [#allocation3], %s250
        // Predicated region
        $region64: #{tpu_custom_call.1} parent=62 // pred_check
          %p252 = pneg %p43
        $region65: #{tpu_custom_call.1} parent=62 // pred_check_branch
          %254 = sbr.rel (%p252) target = $region67
        $region66: #{tpu_custom_call.1} parent=62 // pred_region
          _
        $region67: #{tpu_custom_call.1} parent=62 // pred_fallthru
          _
        %s255 = sand.u32 %s30, 1
        %s256 = sand.u32 %s30, 1
        %s257 = smul.addr %s256, 32
        %s258 = scalar_lea.vmem [#allocation3], %s257
        %p259 = pneg %p43
        %p260 = pneg %p40
        %p261 = pneg %p64
        %p262 = pneg %p61
        %p263 = pneg %p85
        %p264 = pneg %p82
        %p265 = pneg %p106
        %p266 = pneg %p103
        %p267 = pneg %p127
        %p268 = pneg %p124
        %p269 = pneg %p148
        %p270 = pneg %p145
        %p271 = pneg %p174
        %p272 = pneg %p171
        %s273 = sand.u32 %s161, 1
        %s274 = scalar_lea.sflag [#allocation5], %s273
        %s275 = sand.u32 %s161, 1
        %s276 = smul.addr %s275, 4
        %s277 = scalar_lea.vmem [#allocation4], %s276
        %s278 = smul.u32 4, %s22
        %v281 = vld [vmem:[%s1] sm:$0xf]
        %v282 = vld [vmem:[%s1 + $0x4] sm:$0xf]
        %v283 = vld [vmem:[%s1 + $0x8] sm:$0xf]
        %v284 = vld [vmem:[%s1 + $0xc] sm:$0xf]
        %v285 = vld [vmem:[%s251] sm:$0xff]
        %v286 = vld [vmem:[%s251 + $0x8] sm:$0xff]
        %v287 = vld [vmem:[%s251 + $0x10] sm:$0xff]
        %v288 = vld [vmem:[%s251 + $0x18] sm:$0xff]
        %v289 = vld [vmem:[%s3] sm:$0xff]
        %v290 = vld [vmem:[%s3 + $0x8] sm:$0xff]
        %v291 = vld [vmem:[%s3 + $0x10] sm:$0xff]
        %v292 = vld [vmem:[%s3 + $0x18] sm:$0xff]
        %294 = vset.pattern.permute.xlu0 0
        %295 = vperm.xlu0 %294, %v289
        %v296 = vpop.permute.xlu0 %295
        %299 = vset.pattern.permute.xlu0 0
        %300 = vperm.xlu0 %299, %v290
        %v301 = vpop.permute.xlu0 %300
        %304 = vset.pattern.permute.xlu0 0
        %305 = vperm.xlu0 %304, %v291
        %v306 = vpop.permute.xlu0 %305
        %309 = vset.pattern.permute.xlu0 0
        %310 = vperm.xlu0 %309, %v292
        %v311 = vpop.permute.xlu0 %310
        %v317 = vunpack.c.l.b16 %v281
        %v318 = vunpack.c.l.b16 %v282
        %v319 = vunpack.c.l.b16 %v283
        %v320 = vunpack.c.l.b16 %v284
        %v321 = vpack.c.b16 %v318, %v317
        %v322 = vpack.c.b16 %v320, %v319
        %v327 = vunpack.c.l.b16 %v285
        %v328 = vunpack.c.h.b16 %v285
        %v329 = vunpack.c.l.b16 %v286
        %v330 = vunpack.c.h.b16 %v286
        %v331 = vunpack.c.l.b16 %v287
        %v332 = vunpack.c.h.b16 %v287
        %v333 = vunpack.c.l.b16 %v288
        %v334 = vunpack.c.h.b16 %v288
        %v335 = vpack.c.b16 %v331, %v327
        %v336 = vpack.c.b16 %v332, %v328
        %v337 = vpack.c.b16 %v333, %v329
        %v338 = vpack.c.b16 %v334, %v330
        %vm343 = vcmask 130048
        %v345 = vsel %vm343, %v321, 0
        %v348 = vsel %vm343, %v322, 0
        %350 = vmatprep.subr.bf16.mxu0 %v336
        %351 = vmatpush1.bf16.msra.mxu0 %v335
        %352 = vmatprep.subr.bf16.mxu0 0
        %353 = vmatpush1.bf16.msra.mxu0 0
        %354 = vmatprep.subr.bf16.mxu0 0
        %355 = vmatpush1.bf16.msra.mxu0 0
        %356 = vmatprep.subr.bf16.mxu0 0
        %357 = vmatpush1.bf16.msra.mxu0 0
        %358 = vmatprep.subr.bf16.mxu0 0
        %359 = vmatpush1.bf16.msra.mxu0 0
        %360 = vmatprep.subr.bf16.mxu0 0
        %361 = vmatpush1.bf16.msra.mxu0 0
        %362 = vmatprep.subr.bf16.mxu0 0
        %363 = vmatpush1.bf16.msra.mxu0 0
        %364 = vmatprep.subr.bf16.mxu0 0
        %365 = vmatpush1.bf16.msra.mxu0 0
        %366 = vmatprep.subr.bf16.mxu0 0
        %367 = vmatpush1.bf16.msra.mxu0 0
        %368 = vmatprep.subr.bf16.mxu0 0
        %369 = vmatpush1.bf16.msra.mxu0 0
        %370 = vmatprep.subr.bf16.mxu0 0
        %371 = vmatpush1.bf16.msra.mxu0 0
        %372 = vmatprep.subr.bf16.mxu0 0
        %373 = vmatpush1.bf16.msra.mxu0 0
        %374 = vmatprep.subr.bf16.mxu0 0
        %375 = vmatpush1.bf16.msra.mxu0 0
        %376 = vmatprep.subr.bf16.mxu0 0
        %377 = vmatpush1.bf16.msra.mxu0 0
        %378 = vmatprep.subr.bf16.mxu0 0
        %379 = vmatpush1.bf16.msra.mxu0 0
        %380 = vmatprep.subr.bf16.mxu0 0
        %381 = vmatpush1.bf16.msra.mxu0 0
        %382 = vmatprep.mubr.bf16.mxu0 0
        %383 = vmatmul.mubr.bf16.gmra.mrb[0].mxu0 %v345
        %v384 = vpop.f32.mrb[0].mxu0
        %v385 = vadd.f32 %v296, %v384
        %v386 = vpop.f32.mrb[0].mxu0
        %v387 = vadd.f32 %v296, %v386
        %v388 = vpop.f32.mrb[0].mxu0
        %v389 = vadd.f32 %v301, %v388
        %v390 = vpop.f32.mrb[0].mxu0
        %v391 = vadd.f32 %v301, %v390
        %392 = vmatprep.mubr.bf16.mxu0 0
        %393 = vmatmul.mubr.bf16.gmra.mrb[0].mxu0 %v348
        %v394 = vpop.f32.mrb[0].mxu0
        %v395 = vadd.f32 %v306, %v394
        %v396 = vpop.f32.mrb[0].mxu0
        %v397 = vadd.f32 %v306, %v396
        %v398 = vpop.f32.mrb[0].mxu0
        %v399 = vadd.f32 %v311, %v398
        %v400 = vpop.f32.mrb[0].mxu0
        %v401 = vadd.f32 %v311, %v400
        %402 = vdwg.mxu0
        %403 = vmatprep.subr.bf16.mxu0 %v338
        %404 = vmatpush1.bf16.msra.mxu0 %v337
        %405 = vmatprep.subr.bf16.mxu0 0
        %406 = vmatpush1.bf16.msra.mxu0 0
        %407 = vmatprep.subr.bf16.mxu0 0
        %408 = vmatpush1.bf16.msra.mxu0 0
        %409 = vmatprep.subr.bf16.mxu0 0
        %410 = vmatpush1.bf16.msra.mxu0 0
        %411 = vmatprep.subr.bf16.mxu0 0
        %412 = vmatpush1.bf16.msra.mxu0 0
        %413 = vmatprep.subr.bf16.mxu0 0
        %414 = vmatpush1.bf16.msra.mxu0 0
        %415 = vmatprep.subr.bf16.mxu0 0
        %416 = vmatpush1.bf16.msra.mxu0 0
        %417 = vmatprep.subr.bf16.mxu0 0
        %418 = vmatpush1.bf16.msra.mxu0 0
        %419 = vmatprep.subr.bf16.mxu0 0
        %420 = vmatpush1.bf16.msra.mxu0 0
        %421 = vmatprep.subr.bf16.mxu0 0
        %422 = vmatpush1.bf16.msra.mxu0 0
        %423 = vmatprep.subr.bf16.mxu0 0
        %424 = vmatpush1.bf16.msra.mxu0 0
        %425 = vmatprep.subr.bf16.mxu0 0
        %426 = vmatpush1.bf16.msra.mxu0 0
        %427 = vmatprep.subr.bf16.mxu0 0
        %428 = vmatpush1.bf16.msra.mxu0 0
        %429 = vmatprep.subr.bf16.mxu0 0
        %430 = vmatpush1.bf16.msra.mxu0 0
        %431 = vmatprep.subr.bf16.mxu0 0
        %432 = vmatpush1.bf16.msra.mxu0 0
        %433 = vmatprep.subr.bf16.mxu0 0
        %434 = vmatpush1.bf16.msra.mxu0 0
        %435 = vmatprep.mubr.bf16.mxu0 0
        %436 = vmatmul.mubr.bf16.gmra.mrb[0].mxu0 %v345
        %v437 = vpop.f32.mrb[0].mxu0
        %v438 = vadd.f32 %v296, %v437
        %v439 = vpop.f32.mrb[0].mxu0
        %v440 = vadd.f32 %v296, %v439
        %v441 = vpop.f32.mrb[0].mxu0
        %v442 = vadd.f32 %v301, %v441
        %v443 = vpop.f32.mrb[0].mxu0
        %v444 = vadd.f32 %v301, %v443
        %445 = vmatprep.mubr.bf16.mxu0 0
        %446 = vmatmul.mubr.bf16.gmra.mrb[0].mxu0 %v348
        %v447 = vpop.f32.mrb[0].mxu0
        %v448 = vadd.f32 %v306, %v447
        %v449 = vpop.f32.mrb[0].mxu0
        %v450 = vadd.f32 %v306, %v449
        %v451 = vpop.f32.mrb[0].mxu0
        %v452 = vadd.f32 %v311, %v451
        %v453 = vpop.f32.mrb[0].mxu0
        %v454 = vadd.f32 %v311, %v453
        %455 = vdwg.mxu0
        %v456 = vpack.c.bf16 %v389, %v385
        %v457 = vpack.c.bf16 %v391, %v387
        %v458 = vpack.c.bf16 %v442, %v438
        %v459 = vpack.c.bf16 %v444, %v440
        %v460 = vpack.c.bf16 %v399, %v395
        %v461 = vpack.c.bf16 %v401, %v397
        %v462 = vpack.c.bf16 %v452, %v448
        %v463 = vpack.c.bf16 %v454, %v450
        %v464 = vxor.u32 %v456, 2147516416
        %v465 = vxor.u32 %v457, 2147516416
        %v466 = vxor.u32 %v458, 2147516416
        %v467 = vxor.u32 %v459, 2147516416
        %v468 = vxor.u32 %v460, 2147516416
        %v469 = vxor.u32 %v461, 2147516416
        %v470 = vxor.u32 %v462, 2147516416
        %v471 = vxor.u32 %v463, 2147516416
        %v473 = vmul.bf16 %v464, 1069105081
        %v474 = vpow.bf16.pop %v473
        %v476 = vmul.bf16 %v465, 1069105081
        %v477 = vpow.bf16.pop %v476
        %v479 = vmul.bf16 %v466, 1069105081
        %v480 = vpow.bf16.pop %v479
        %v482 = vmul.bf16 %v467, 1069105081
        %v483 = vpow.bf16.pop %v482
        %v485 = vmul.bf16 %v468, 1069105081
        %v486 = vpow.bf16.pop %v485
        %v488 = vmul.bf16 %v469, 1069105081
        %v489 = vpow.bf16.pop %v488
        %v491 = vmul.bf16 %v470, 1069105081
        %v492 = vpow.bf16.pop %v491
        %v494 = vmul.bf16 %v471, 1069105081
        %v495 = vpow.bf16.pop %v494
        %v496 = vadd.bf16 %v474, 1065369472
        %v497 = vadd.bf16 %v477, 1065369472
        %v498 = vadd.bf16 %v480, 1065369472
        %v499 = vadd.bf16 %v483, 1065369472
        %v500 = vadd.bf16 %v486, 1065369472
        %v501 = vadd.bf16 %v489, 1065369472
        %v502 = vadd.bf16 %v492, 1065369472
        %v503 = vadd.bf16 %v495, 1065369472
        %v504 = vrcp.bf16.pop %v496
        %v505 = vmul.bf16 1065369472, %v504
        %v506 = vrcp.bf16.pop %v497
        %v507 = vmul.bf16 1065369472, %v506
        %v508 = vrcp.bf16.pop %v498
        %v509 = vmul.bf16 1065369472, %v508
        %v510 = vrcp.bf16.pop %v499
        %v511 = vmul.bf16 1065369472, %v510
        %v512 = vrcp.bf16.pop %v500
        %v513 = vmul.bf16 1065369472, %v512
        %v514 = vrcp.bf16.pop %v501
        %v515 = vmul.bf16 1065369472, %v514
        %v516 = vrcp.bf16.pop %v502
        %v517 = vmul.bf16 1065369472, %v516
        %v518 = vrcp.bf16.pop %v503
        %v519 = vmul.bf16 1065369472, %v518
        %v520 = vmul.bf16 %v456, %v505
        %v521 = vmul.bf16 %v457, %v507
        %v522 = vmul.bf16 %v458, %v509
        %v523 = vmul.bf16 %v459, %v511
        %v524 = vmul.bf16 %v460, %v513
        %v525 = vmul.bf16 %v461, %v515
        %v526 = vmul.bf16 %v462, %v517
        %v527 = vmul.bf16 %v463, %v519
        %v528 = vld [vmem:[%s2] sm:$0xf]
        %v529 = vld [vmem:[%s2 + $0x4] sm:$0xf]
        %v530 = vld [vmem:[%s2 + $0x8] sm:$0xf]
        %v531 = vld [vmem:[%s2 + $0xc] sm:$0xf]
        %s532 = scalar_lea.vmem %s3, 32
        %v533 = vld [vmem:[%s532] sm:$0xff]
        %v534 = vld [vmem:[%s532 + $0x8] sm:$0xff]
        %v535 = vld [vmem:[%s532 + $0x10] sm:$0xff]
        %v536 = vld [vmem:[%s532 + $0x18] sm:$0xff]
        %538 = vset.pattern.permute.xlu0 0
        %539 = vperm.xlu0 %538, %v533
        %v540 = vpop.permute.xlu0 %539
        %543 = vset.pattern.permute.xlu0 0
        %544 = vperm.xlu0 %543, %v534
        %v545 = vpop.permute.xlu0 %544
        %548 = vset.pattern.permute.xlu0 0
        %549 = vperm.xlu0 %548, %v535
        %v550 = vpop.permute.xlu0 %549
        %553 = vset.pattern.permute.xlu0 0
        %554 = vperm.xlu0 %553, %v536
        %v555 = vpop.permute.xlu0 %554
        %v561 = vunpack.c.l.b16 %v528
        %v562 = vunpack.c.l.b16 %v529
        %v563 = vunpack.c.l.b16 %v530
        %v564 = vunpack.c.l.b16 %v531
        %v565 = vpack.c.b16 %v562, %v561
        %v566 = vpack.c.b16 %v564, %v563
        %vm567 = vcmask 261120
        %v569 = vsel %vm567, %v565, 0
        %v572 = vsel %vm567, %v566, 0
        %574 = vmatprep.subr.bf16.mxu0 %v521
        %575 = vmatpush1.bf16.msra.mxu0 %v520
        %576 = vmatprep.subr.bf16.mxu0 %v525
        %577 = vmatpush1.bf16.msra.mxu0 %v524
        %578 = vmatprep.subr.bf16.mxu0 0
        %579 = vmatpush1.bf16.msra.mxu0 0
        %580 = vmatprep.subr.bf16.mxu0 0
        %581 = vmatpush1.bf16.msra.mxu0 0
        %582 = vmatprep.subr.bf16.mxu0 0
        %583 = vmatpush1.bf16.msra.mxu0 0
        %584 = vmatprep.subr.bf16.mxu0 0
        %585 = vmatpush1.bf16.msra.mxu0 0
        %586 = vmatprep.subr.bf16.mxu0 0
        %587 = vmatpush1.bf16.msra.mxu0 0
        %588 = vmatprep.subr.bf16.mxu0 0
        %589 = vmatpush1.bf16.msra.mxu0 0
        %590 = vmatprep.subr.bf16.mxu0 0
        %591 = vmatpush1.bf16.msra.mxu0 0
        %592 = vmatprep.subr.bf16.mxu0 0
        %593 = vmatpush1.bf16.msra.mxu0 0
        %594 = vmatprep.subr.bf16.mxu0 0
        %595 = vmatpush1.bf16.msra.mxu0 0
        %596 = vmatprep.subr.bf16.mxu0 0
        %597 = vmatpush1.bf16.msra.mxu0 0
        %598 = vmatprep.subr.bf16.mxu0 0
        %599 = vmatpush1.bf16.msra.mxu0 0
        %600 = vmatprep.subr.bf16.mxu0 0
        %601 = vmatpush1.bf16.msra.mxu0 0
        %602 = vmatprep.subr.bf16.mxu0 0
        %603 = vmatpush1.bf16.msra.mxu0 0
        %604 = vmatprep.subr.bf16.mxu0 0
        %605 = vmatpush1.bf16.msra.mxu0 0
        %606 = vmatprep.mubr.bf16.mxu0 0
        %607 = vmatmul.mubr.bf16.gmra.mrb[0].mxu0 %v569
        %v608 = vpop.f32.mrb[0].mxu0
        %v609 = vadd.f32 %v540, %v608
        %v610 = vpop.f32.mrb[0].mxu0
        %v611 = vadd.f32 %v540, %v610
        %v612 = vpop.f32.mrb[0].mxu0
        %v613 = vadd.f32 %v545, %v612
        %v614 = vpop.f32.mrb[0].mxu0
        %v615 = vadd.f32 %v545, %v614
        %616 = vmatprep.mubr.bf16.mxu0 0
        %617 = vmatmul.mubr.bf16.gmra.mrb[0].mxu0 %v572
        %v618 = vpop.f32.mrb[0].mxu0
        %v619 = vadd.f32 %v550, %v618
        %v620 = vpop.f32.mrb[0].mxu0
        %v621 = vadd.f32 %v550, %v620
        %v622 = vpop.f32.mrb[0].mxu0
        %v623 = vadd.f32 %v555, %v622
        %v624 = vpop.f32.mrb[0].mxu0
        %v625 = vadd.f32 %v555, %v624
        %626 = vdwg.mxu0
        %627 = vmatprep.subr.bf16.mxu0 %v523
        %628 = vmatpush1.bf16.msra.mxu0 %v522
        %629 = vmatprep.subr.bf16.mxu0 %v527
        %630 = vmatpush1.bf16.msra.mxu0 %v526
        %631 = vmatprep.subr.bf16.mxu0 0
        %632 = vmatpush1.bf16.msra.mxu0 0
        %633 = vmatprep.subr.bf16.mxu0 0
        %634 = vmatpush1.bf16.msra.mxu0 0
        %635 = vmatprep.subr.bf16.mxu0 0
        %636 = vmatpush1.bf16.msra.mxu0 0
        %637 = vmatprep.subr.bf16.mxu0 0
        %638 = vmatpush1.bf16.msra.mxu0 0
        %639 = vmatprep.subr.bf16.mxu0 0
        %640 = vmatpush1.bf16.msra.mxu0 0
        %641 = vmatprep.subr.bf16.mxu0 0
        %642 = vmatpush1.bf16.msra.mxu0 0
        %643 = vmatprep.subr.bf16.mxu0 0
        %644 = vmatpush1.bf16.msra.mxu0 0
        %645 = vmatprep.subr.bf16.mxu0 0
        %646 = vmatpush1.bf16.msra.mxu0 0
        %647 = vmatprep.subr.bf16.mxu0 0
        %648 = vmatpush1.bf16.msra.mxu0 0
        %649 = vmatprep.subr.bf16.mxu0 0
        %650 = vmatpush1.bf16.msra.mxu0 0
        %651 = vmatprep.subr.bf16.mxu0 0
        %652 = vmatpush1.bf16.msra.mxu0 0
        %653 = vmatprep.subr.bf16.mxu0 0
        %654 = vmatpush1.bf16.msra.mxu0 0
        %655 = vmatprep.subr.bf16.mxu0 0
        %656 = vmatpush1.bf16.msra.mxu0 0
        %657 = vmatprep.subr.bf16.mxu0 0
        %658 = vmatpush1.bf16.msra.mxu0 0
        %659 = vmatprep.mubr.bf16.mxu0 0
        %660 = vmatmul.mubr.bf16.gmra.mrb[0].mxu0 %v569
        %v661 = vpop.f32.mrb[0].mxu0
        %v662 = vadd.f32 %v540, %v661
        %v663 = vpop.f32.mrb[0].mxu0
        %v664 = vadd.f32 %v540, %v663
        %v665 = vpop.f32.mrb[0].mxu0
        %v666 = vadd.f32 %v545, %v665
        %v667 = vpop.f32.mrb[0].mxu0
        %v668 = vadd.f32 %v545, %v667
        %669 = vmatprep.mubr.bf16.mxu0 0
        %670 = vmatmul.mubr.bf16.gmra.mrb[0].mxu0 %v572
        %v671 = vpop.f32.mrb[0].mxu0
        %v672 = vadd.f32 %v550, %v671
        %v673 = vpop.f32.mrb[0].mxu0
        %v674 = vadd.f32 %v550, %v673
        %v675 = vpop.f32.mrb[0].mxu0
        %v676 = vadd.f32 %v555, %v675
        %v677 = vpop.f32.mrb[0].mxu0
        %v678 = vadd.f32 %v555, %v677
        %679 = vdwg.mxu0
        %v680 = vpack.c.bf16 %v613, %v609
        %v681 = vpack.c.bf16 %v615, %v611
        %v682 = vpack.c.bf16 %v666, %v662
        %v683 = vpack.c.bf16 %v668, %v664
        %v684 = vpack.c.bf16 %v623, %v619
        %v685 = vpack.c.bf16 %v625, %v621
        %v686 = vpack.c.bf16 %v676, %v672
        %v687 = vpack.c.bf16 %v678, %v674
        %v688 = vxor.u32 %v680, 2147516416
        %v689 = vxor.u32 %v681, 2147516416
        %v690 = vxor.u32 %v682, 2147516416
        %v691 = vxor.u32 %v683, 2147516416
        %v692 = vxor.u32 %v684, 2147516416
        %v693 = vxor.u32 %v685, 2147516416
        %v694 = vxor.u32 %v686, 2147516416
        %v695 = vxor.u32 %v687, 2147516416
        %v697 = vmul.bf16 %v688, 1069105081
        %v698 = vpow.bf16.pop %v697
        %v700 = vmul.bf16 %v689, 1069105081
        %v701 = vpow.bf16.pop %v700
        %v703 = vmul.bf16 %v690, 1069105081
        %v704 = vpow.bf16.pop %v703
        %v706 = vmul.bf16 %v691, 1069105081
        %v707 = vpow.bf16.pop %v706
        %v709 = vmul.bf16 %v692, 1069105081
        %v710 = vpow.bf16.pop %v709
        %v712 = vmul.bf16 %v693, 1069105081
        %v713 = vpow.bf16.pop %v712
        %v715 = vmul.bf16 %v694, 1069105081
        %v716 = vpow.bf16.pop %v715
        %v718 = vmul.bf16 %v695, 1069105081
        %v719 = vpow.bf16.pop %v718
        %v720 = vadd.bf16 %v698, 1065369472
        %v721 = vadd.bf16 %v701, 1065369472
        %v722 = vadd.bf16 %v704, 1065369472
        %v723 = vadd.bf16 %v707, 1065369472
        %v724 = vadd.bf16 %v710, 1065369472
        %v725 = vadd.bf16 %v713, 1065369472
        %v726 = vadd.bf16 %v716, 1065369472
        %v727 = vadd.bf16 %v719, 1065369472
        %v728 = vrcp.bf16.pop %v720
        %v729 = vmul.bf16 1065369472, %v728
        %v730 = vrcp.bf16.pop %v721
        %v731 = vmul.bf16 1065369472, %v730
        %v732 = vrcp.bf16.pop %v722
        %v733 = vmul.bf16 1065369472, %v732
        %v734 = vrcp.bf16.pop %v723
        %v735 = vmul.bf16 1065369472, %v734
        %v736 = vrcp.bf16.pop %v724
        %v737 = vmul.bf16 1065369472, %v736
        %v738 = vrcp.bf16.pop %v725
        %v739 = vmul.bf16 1065369472, %v738
        %v740 = vrcp.bf16.pop %v726
        %v741 = vmul.bf16 1065369472, %v740
        %v742 = vrcp.bf16.pop %v727
        %v743 = vmul.bf16 1065369472, %v742
        %v744 = vmul.bf16 %v680, %v729
        %v745 = vmul.bf16 %v681, %v731
        %v746 = vmul.bf16 %v682, %v733
        %v747 = vmul.bf16 %v683, %v735
        %v748 = vmul.bf16 %v684, %v737
        %v749 = vmul.bf16 %v685, %v739
        %v750 = vmul.bf16 %v686, %v741
        %v751 = vmul.bf16 %v687, %v743
        %s752 = scalar_lea.vmem %s2, 16
        %v753 = vld [vmem:[%s752] sm:$0xf]
        %v754 = vld [vmem:[%s752 + $0x4] sm:$0xf]
        %v755 = vld [vmem:[%s752 + $0x8] sm:$0xf]
        %v756 = vld [vmem:[%s752 + $0xc] sm:$0xf]
        %s757 = scalar_lea.vmem %s3, 64
        %v758 = vld [vmem:[%s757] sm:$0xff]
        %v759 = vld [vmem:[%s757 + $0x8] sm:$0xff]
        %v760 = vld [vmem:[%s757 + $0x10] sm:$0xff]
        %v761 = vld [vmem:[%s757 + $0x18] sm:$0xff]
        %763 = vset.pattern.permute.xlu0 0
        %764 = vperm.xlu0 %763, %v758
        %v765 = vpop.permute.xlu0 %764
        %768 = vset.pattern.permute.xlu0 0
        %769 = vperm.xlu0 %768, %v759
        %v770 = vpop.permute.xlu0 %769
        %773 = vset.pattern.permute.xlu0 0
        %774 = vperm.xlu0 %773, %v760
        %v775 = vpop.permute.xlu0 %774
        %778 = vset.pattern.permute.xlu0 0
        %779 = vperm.xlu0 %778, %v761
        %v780 = vpop.permute.xlu0 %779
        %v786 = vunpack.c.l.b16 %v753
        %v787 = vunpack.c.l.b16 %v754
        %v788 = vunpack.c.l.b16 %v755
        %v789 = vunpack.c.l.b16 %v756
        %v790 = vpack.c.b16 %v787, %v786
        %v791 = vpack.c.b16 %v789, %v788
        %v793 = vsel %vm567, %v790, 0
        %v796 = vsel %vm567, %v791, 0
        %798 = vmatprep.subr.bf16.mxu0 %v745
        %799 = vmatpush1.bf16.msra.mxu0 %v744
        %800 = vmatprep.subr.bf16.mxu0 %v749
        %801 = vmatpush1.bf16.msra.mxu0 %v748
        %802 = vmatprep.subr.bf16.mxu0 0
        %803 = vmatpush1.bf16.msra.mxu0 0
        %804 = vmatprep.subr.bf16.mxu0 0
        %805 = vmatpush1.bf16.msra.mxu0 0
        %806 = vmatprep.subr.bf16.mxu0 0
        %807 = vmatpush1.bf16.msra.mxu0 0
        %808 = vmatprep.subr.bf16.mxu0 0
        %809 = vmatpush1.bf16.msra.mxu0 0
        %810 = vmatprep.subr.bf16.mxu0 0
        %811 = vmatpush1.bf16.msra.mxu0 0
        %812 = vmatprep.subr.bf16.mxu0 0
        %813 = vmatpush1.bf16.msra.mxu0 0
        %814 = vmatprep.subr.bf16.mxu0 0
        %815 = vmatpush1.bf16.msra.mxu0 0
        %816 = vmatprep.subr.bf16.mxu0 0
        %817 = vmatpush1.bf16.msra.mxu0 0
        %818 = vmatprep.subr.bf16.mxu0 0
        %819 = vmatpush1.bf16.msra.mxu0 0
        %820 = vmatprep.subr.bf16.mxu0 0
        %821 = vmatpush1.bf16.msra.mxu0 0
        %822 = vmatprep.subr.bf16.mxu0 0
        %823 = vmatpush1.bf16.msra.mxu0 0
        %824 = vmatprep.subr.bf16.mxu0 0
        %825 = vmatpush1.bf16.msra.mxu0 0
        %826 = vmatprep.subr.bf16.mxu0 0
        %827 = vmatpush1.bf16.msra.mxu0 0
        %828 = vmatprep.subr.bf16.mxu0 0
        %829 = vmatpush1.bf16.msra.mxu0 0
        %830 = vmatprep.mubr.bf16.mxu0 0
        %831 = vmatmul.mubr.bf16.gmra.mrb[0].mxu0 %v793
        %v832 = vpop.f32.mrb[0].mxu0
        %v833 = vadd.f32 %v765, %v832
        %v834 = vpop.f32.mrb[0].mxu0
        %v835 = vadd.f32 %v765, %v834
        %v836 = vpop.f32.mrb[0].mxu0
        %v837 = vadd.f32 %v770, %v836
        %v838 = vpop.f32.mrb[0].mxu0
        %v839 = vadd.f32 %v770, %v838
        %840 = vmatprep.mubr.bf16.mxu0 0
        %841 = vmatmul.mubr.bf16.gmra.mrb[0].mxu0 %v796
        %v842 = vpop.f32.mrb[0].mxu0
        %v843 = vadd.f32 %v775, %v842
        %v844 = vpop.f32.mrb[0].mxu0
        %v845 = vadd.f32 %v775, %v844
        %v846 = vpop.f32.mrb[0].mxu0
        %v847 = vadd.f32 %v780, %v846
        %v848 = vpop.f32.mrb[0].mxu0
        %v849 = vadd.f32 %v780, %v848
        %850 = vdwg.mxu0
        %851 = vmatprep.subr.bf16.mxu0 %v747
        %852 = vmatpush1.bf16.msra.mxu0 %v746
        %853 = vmatprep.subr.bf16.mxu0 %v751
        %854 = vmatpush1.bf16.msra.mxu0 %v750
        %855 = vmatprep.subr.bf16.mxu0 0
        %856 = vmatpush1.bf16.msra.mxu0 0
        %857 = vmatprep.subr.bf16.mxu0 0
        %858 = vmatpush1.bf16.msra.mxu0 0
        %859 = vmatprep.subr.bf16.mxu0 0
        %860 = vmatpush1.bf16.msra.mxu0 0
        %861 = vmatprep.subr.bf16.mxu0 0
        %862 = vmatpush1.bf16.msra.mxu0 0
        %863 = vmatprep.subr.bf16.mxu0 0
        %864 = vmatpush1.bf16.msra.mxu0 0
        %865 = vmatprep.subr.bf16.mxu0 0
        %866 = vmatpush1.bf16.msra.mxu0 0
        %867 = vmatprep.subr.bf16.mxu0 0
        %868 = vmatpush1.bf16.msra.mxu0 0
        %869 = vmatprep.subr.bf16.mxu0 0
        %870 = vmatpush1.bf16.msra.mxu0 0
        %871 = vmatprep.subr.bf16.mxu0 0
        %872 = vmatpush1.bf16.msra.mxu0 0
        %873 = vmatprep.subr.bf16.mxu0 0
        %874 = vmatpush1.bf16.msra.mxu0 0
        %875 = vmatprep.subr.bf16.mxu0 0
        %876 = vmatpush1.bf16.msra.mxu0 0
        %877 = vmatprep.subr.bf16.mxu0 0
        %878 = vmatpush1.bf16.msra.mxu0 0
        %879 = vmatprep.subr.bf16.mxu0 0
        %880 = vmatpush1.bf16.msra.mxu0 0
        %881 = vmatprep.subr.bf16.mxu0 0
        %882 = vmatpush1.bf16.msra.mxu0 0
        %883 = vmatprep.mubr.bf16.mxu0 0
        %884 = vmatmul.mubr.bf16.gmra.mrb[0].mxu0 %v793
        %v885 = vpop.f32.mrb[0].mxu0
        %v886 = vadd.f32 %v765, %v885
        %v887 = vpop.f32.mrb[0].mxu0
        %v888 = vadd.f32 %v765, %v887
        %v889 = vpop.f32.mrb[0].mxu0
        %v890 = vadd.f32 %v770, %v889
        %v891 = vpop.f32.mrb[0].mxu0
        %v892 = vadd.f32 %v770, %v891
        %893 = vmatprep.mubr.bf16.mxu0 0
        %894 = vmatmul.mubr.bf16.gmra.mrb[0].mxu0 %v796
        %v895 = vpop.f32.mrb[0].mxu0
        %v896 = vadd.f32 %v775, %v895
        %v897 = vpop.f32.mrb[0].mxu0
        %v898 = vadd.f32 %v775, %v897
        %v899 = vpop.f32.mrb[0].mxu0
        %v900 = vadd.f32 %v780, %v899
        %v901 = vpop.f32.mrb[0].mxu0
        %v902 = vadd.f32 %v780, %v901
        %903 = vdwg.mxu0
        %v904 = vpack.c.bf16 %v837, %v833
        %v905 = vpack.c.bf16 %v839, %v835
        %v906 = vpack.c.bf16 %v890, %v886
        %v907 = vpack.c.bf16 %v892, %v888
        %v908 = vpack.c.bf16 %v847, %v843
        %v909 = vpack.c.bf16 %v849, %v845
        %v910 = vpack.c.bf16 %v900, %v896
        %v911 = vpack.c.bf16 %v902, %v898
        %v912 = vxor.u32 %v904, 2147516416
        %v913 = vxor.u32 %v905, 2147516416
        %v914 = vxor.u32 %v906, 2147516416
        %v915 = vxor.u32 %v907, 2147516416
        %v916 = vxor.u32 %v908, 2147516416
        %v917 = vxor.u32 %v909, 2147516416
        %v918 = vxor.u32 %v910, 2147516416
        %v919 = vxor.u32 %v911, 2147516416
        %v921 = vmul.bf16 %v912, 1069105081
        %v922 = vpow.bf16.pop %v921
        %v924 = vmul.bf16 %v913, 1069105081
        %v925 = vpow.bf16.pop %v924
        %v927 = vmul.bf16 %v914, 1069105081
        %v928 = vpow.bf16.pop %v927
        %v930 = vmul.bf16 %v915, 1069105081
        %v931 = vpow.bf16.pop %v930
        %v933 = vmul.bf16 %v916, 1069105081
        %v934 = vpow.bf16.pop %v933
        %v936 = vmul.bf16 %v917, 1069105081
        %v937 = vpow.bf16.pop %v936
        %v939 = vmul.bf16 %v918, 1069105081
        %v940 = vpow.bf16.pop %v939
        %v942 = vmul.bf16 %v919, 1069105081
        %v943 = vpow.bf16.pop %v942
        %v944 = vadd.bf16 %v922, 1065369472
        %v945 = vadd.bf16 %v925, 1065369472
        %v946 = vadd.bf16 %v928, 1065369472
        %v947 = vadd.bf16 %v931, 1065369472
        %v948 = vadd.bf16 %v934, 1065369472
        %v949 = vadd.bf16 %v937, 1065369472
        %v950 = vadd.bf16 %v940, 1065369472
        %v951 = vadd.bf16 %v943, 1065369472
        %v952 = vrcp.bf16.pop %v944
        %v953 = vmul.bf16 1065369472, %v952
        %v954 = vrcp.bf16.pop %v945
        %v955 = vmul.bf16 1065369472, %v954
        %v956 = vrcp.bf16.pop %v946
        %v957 = vmul.bf16 1065369472, %v956
        %v958 = vrcp.bf16.pop %v947
        %v959 = vmul.bf16 1065369472, %v958
        %v960 = vrcp.bf16.pop %v948
        %v961 = vmul.bf16 1065369472, %v960
        %v962 = vrcp.bf16.pop %v949
        %v963 = vmul.bf16 1065369472, %v962
        %v964 = vrcp.bf16.pop %v950
        %v965 = vmul.bf16 1065369472, %v964
        %v966 = vrcp.bf16.pop %v951
        %v967 = vmul.bf16 1065369472, %v966
        %v968 = vmul.bf16 %v904, %v953
        %v969 = vmul.bf16 %v905, %v955
        %v970 = vmul.bf16 %v906, %v957
        %v971 = vmul.bf16 %v907, %v959
        %v972 = vmul.bf16 %v908, %v961
        %v973 = vmul.bf16 %v909, %v963
        %v974 = vmul.bf16 %v910, %v965
        %v975 = vmul.bf16 %v911, %v967
        %v976 = vunpack.c.l.bf16 %v968
        %v977 = vunpack.c.l.bf16 %v969
        %v978 = vunpack.c.l.bf16 %v970
        %v979 = vunpack.c.l.bf16 %v971
        %v980 = vunpack.c.h.bf16 %v968
        %v981 = vunpack.c.h.bf16 %v969
        %v982 = vunpack.c.h.bf16 %v970
        %v983 = vunpack.c.h.bf16 %v971
        %v984 = vunpack.c.l.bf16 %v972
        %v985 = vunpack.c.l.bf16 %v973
        %v986 = vunpack.c.l.bf16 %v974
        %v987 = vunpack.c.l.bf16 %v975
        %v988 = vunpack.c.h.bf16 %v972
        %v989 = vunpack.c.h.bf16 %v973
        %v990 = vunpack.c.h.bf16 %v974
        %v991 = vunpack.c.h.bf16 %v975
        %v992 = vld [vmem:[%s4] sm:$0xff]
        %v993 = vld [vmem:[%s4 + $0x8] sm:$0xff]
        %v994 = vld [vmem:[%s4 + $0x10] sm:$0xff]
        %v995 = vld [vmem:[%s4 + $0x18] sm:$0xff]
        %997 = vset.pattern.permute.xlu0 0
        %998 = vperm.xlu0 %997, %v992
        %v999 = vpop.permute.xlu0 %998
        %1002 = vset.pattern.permute.xlu0 0
        %1003 = vperm.xlu0 %1002, %v993
        %v1004 = vpop.permute.xlu0 %1003
        %1007 = vset.pattern.permute.xlu0 0
        %1008 = vperm.xlu0 %1007, %v994
        %v1009 = vpop.permute.xlu0 %1008
        %1012 = vset.pattern.permute.xlu0 0
        %1013 = vperm.xlu0 %1012, %v995
        %v1014 = vpop.permute.xlu0 %1013
        %v1016 = vmul.f32 %v976, %v999
        %v1017 = vmul.f32 %v977, %v999
        %v1018 = vmul.f32 %v978, %v999
        %v1019 = vmul.f32 %v979, %v999
        %v1020 = vmul.f32 %v980, %v1004
        %v1021 = vmul.f32 %v981, %v1004
        %v1022 = vmul.f32 %v982, %v1004
        %v1023 = vmul.f32 %v983, %v1004
        %v1024 = vmul.f32 %v984, %v1009
        %v1025 = vmul.f32 %v985, %v1009
        %v1026 = vmul.f32 %v986, %v1009
        %v1027 = vmul.f32 %v987, %v1009
        %v1028 = vmul.f32 %v988, %v1014
        %v1029 = vmul.f32 %v989, %v1014
        %v1030 = vmul.f32 %v990, %v1014
        %v1031 = vmul.f32 %v991, %v1014
        %v1032 = vadd.f32 %v1016, %v1020
        %v1033 = vadd.f32 %v1032, %v1024
        %v1034 = vadd.f32 %v1033, %v1028
        %v1035 = vrot.slane %v1034, 4
        %v1036 = vadd.f32 %v1034, %v1035
        %v1037 = vrot.slane %v1036, 2
        %v1038 = vadd.f32 %v1036, %v1037
        %v1039 = vrot.slane %v1038, 1
        %v1040 = vadd.f32 %v1038, %v1039
        %v1041 = vadd.f32 %v1017, %v1021
        %v1042 = vadd.f32 %v1041, %v1025
        %v1043 = vadd.f32 %v1042, %v1029
        %v1044 = vrot.slane %v1043, 4
        %v1045 = vadd.f32 %v1043, %v1044
        %v1046 = vrot.slane %v1045, 2
        %v1047 = vadd.f32 %v1045, %v1046
        %v1048 = vrot.slane %v1047, 1
        %v1049 = vadd.f32 %v1047, %v1048
        %v1050 = vadd.f32 %v1018, %v1022
        %v1051 = vadd.f32 %v1050, %v1026
        %v1052 = vadd.f32 %v1051, %v1030
        %v1053 = vrot.slane %v1052, 4
        %v1054 = vadd.f32 %v1052, %v1053
        %v1055 = vrot.slane %v1054, 2
        %v1056 = vadd.f32 %v1054, %v1055
        %v1057 = vrot.slane %v1056, 1
        %v1058 = vadd.f32 %v1056, %v1057
        %v1059 = vadd.f32 %v1019, %v1023
        %v1060 = vadd.f32 %v1059, %v1027
        %v1061 = vadd.f32 %v1060, %v1031
        %v1062 = vrot.slane %v1061, 4
        %v1063 = vadd.f32 %v1061, %v1062
        %v1064 = vrot.slane %v1063, 2
        %v1065 = vadd.f32 %v1063, %v1064
        %v1066 = vrot.slane %v1065, 1
        %v1067 = vadd.f32 %v1065, %v1066
        %v1068 = vld [vmem:[#allocation2] sm:$0x1]
        %1070 = vset.pattern.permute.xlu0 0
        %1071 = vperm.xlu0 %1070, %v1068
        %v1072 = vpop.permute.xlu0 %1071
        %v1074 = vlaneseq
        %v1075 = vshrl.u32 %v1074, 7
        %v1076 = vsub.s32 0, %v1075
        %v1077 = vrot.slane %v1072, %v1076
        %v1078 = vadd.f32 %v1040, %v1077
        %v1079 = vadd.f32 %v1049, %v1077
        %v1080 = vadd.f32 %v1058, %v1077
        %v1081 = vadd.f32 %v1067, %v1077
        %v1086 = vcombine.low %v1078, %v1079
        %v1087 = vcombine.low %v1080, %v1081
        %v1089 = vunpack.c.l.s4 1966171168
        %v1090 = vunpack.c.0.s8 %v1089
        %v1091 = vlaneseq
        %v1092 = vshrl.u32 %v1091, 7
        %v1093 = vsub.s32 %v1090, %v1092
        %v1094 = vrot.slane %v1086, %v1093
        %v1096 = vunpack.c.l.s4 1966171168
        %v1097 = vunpack.c.0.s8 %v1096
        %v1098 = vlaneseq
        %v1099 = vshrl.u32 %v1098, 7
        %v1100 = vsub.s32 %v1097, %v1099
        %v1101 = vrot.slane %v1087, %v1100
        %v1102 = vcombine.low %v1094, %v1101
        %v1104 = vunpack.c.l.s4 1966171168
        %v1105 = vunpack.c.0.s8 %v1104
        %v1106 = vlaneseq
        %v1107 = vshrl.u32 %v1106, 7
        %v1108 = vsub.s32 %v1105, %v1107
        %v1109 = vrot.slane %v1102, %v1108
        %v1111 = vlaneseq
        %vm1112 = vcmp.ge.s32.totalorder %v1111, 0
        %vm1113 = vcmp.lt.s32.totalorder %v1111, 512
        %vm1114 = vmand %vm1112, %vm1113
        %1115 = vst.msk [vmem:[%s277] sm:$0xf] %vm1114, %v1109
        %s1116 = sand.u32 %s161, 1
        %s1117 = scalar_lea.sflag [#allocation5], %s1116
        %s1118 = sand.u32 %s161, 1
        %s1119 = smul.addr %s1118, 4
        %s1120 = scalar_lea.vmem [#allocation4], %s1119
        // Predicated region
        $region68: #{tpu_custom_call.1} parent=62 // pred_check
          %p1121 = pneg %p171
        $region69: #{tpu_custom_call.1} parent=62 // pred_check_branch
          %1123 = sbr.rel (%p1121) target = $region71
        $region70: #{tpu_custom_call.1} parent=62 // pred_region
          %s1125 = ssub.s32 64, 64
          %1126 = vsyncadd %s1117, %s1125
          %s1127 = smul.addr %s22, 4
          %s1128 = smul.addr %s1127, 16
          %s1129 = scalar_lea.hbm %s6, %s1128
          %s1131 = sshll.u32 %s1120, 4
          %s1132 = int_to_ptr.vmem [resolvable:$true] %s1131
          %1134 = dma.vmem_to_hbm [thread:$0]  %s1132, 64, %s1129, %s1117
        $region71: #{tpu_custom_call.1} parent=62 // pred_fallthru
          _
      $region63: #{tpu_custom_call.1} parent=5 // pred_fallthru
        _
      %p1135 = scmp.le.s32.totalorder 2, %s17
      // Predicated region
      $region72: #{tpu_custom_call.1} parent=5 // pred_check
        %p1136 = pneg %p1135
      $region73: #{tpu_custom_call.1} parent=5 // pred_check_branch
        %1138 = sbr.rel (%p1136) target = $region75
      $region74: #{tpu_custom_call.1} parent=5 // pred_region
        %s1139 = ssub.s32 %s17, 2
        // Predicated region
        $region76: #{tpu_custom_call.1} parent=74 // pred_check
          %p1140 = pneg %p177
        $region77: #{tpu_custom_call.1} parent=74 // pred_check_branch
          %1142 = sbr.rel (%p1140) target = $region79
        $region78: #{tpu_custom_call.1} parent=74 // pred_region
          %s1143 = sand.u32 %s162, 1
          %s1144 = scalar_lea.sflag [#allocation5], %s1143
          %s1145 = sand.u32 %s162, 1
          %s1146 = smul.addr %s1145, 4
          %s1147 = scalar_lea.vmem [#allocation4], %s1146
          %1148 = dma.done %s1144, 64
        $region79: #{tpu_custom_call.1} parent=74 // pred_fallthru
          _
      $region75: #{tpu_custom_call.1} parent=5 // pred_fallthru
        _
    $region6: #{tpu_custom_call.1} parent=1 // loop_footer
      %s21 = sadd.s32 1, %s17
    $region7: #{tpu_custom_call.1} parent=1 // loop_footer_branch
      %16 = sbr.rel target = $region3
    $region8: #{tpu_custom_call.1} parent=1 // loop_exit
      _
    %1149 = vsyncpa [#allocation5], 1
    %s1150 = scalar_lea.sflag [#allocation5], 1
    %1151 = vsyncpa %s1150, 1

</llo_original>
